<compile_context>
chip_gen: v6e
topology: v6e:2x2x1
jax: 0.10.0
libtpu: 0.0.40
codegen_flags: <defaults>
</compile_context>

<pallas_src>
import functools

import jax
import jax.numpy as jnp
from jax.experimental import pallas as pl
from jax.experimental.pallas import tpu as pltpu

_LANES = 128
_SUBLANES = 8
_MAX_BLOCK_ROWS = 4096        # 2 MiB f32 blocks: ~86% of HBM roofline
_VMEM_BUDGET_BYTES = 12 << 20  # double-buffered working set; safe on v5e default


# ---------------- in-kernel helpers ----------------

def _partial_sum(s):
    # (block_rows, 128) f32 -> (8, 128) partial sum (XLU sublane reduce).
    return s.reshape(s.shape[0] // _SUBLANES, _SUBLANES, _LANES).sum(axis=0)


def _mask_rows(x, valid_rows):
    if valid_rows is None:
        return x
    row = jax.lax.broadcasted_iota(jnp.int32, x.shape, 0)
    return jnp.where(row < valid_rows, x, 0.0)


def _masked_store(tail_rows, tile_axis, emit):
    """emit(valid_rows_or_None) writes the partial(s). Only the ragged last
    tile pays for the iota/compare/select mask (interior tiles skip it)."""
    if tail_rows is None:
        emit(None)
        return
    last = pl.num_programs(tile_axis) - 1
    @pl.when(pl.program_id(tile_axis) != last)
    def _():
        emit(None)
    @pl.when(pl.program_id(tile_axis) == last)
    def _():
        emit(tail_rows)


# ---------------- kernels ----------------

def _l1_none_kernel(p_ref, t_ref, o_ref, *, scale):
    # elementwise |pred - target| ('none', no weight), in the input dtype.
    d = jnp.abs(p_ref[...] - t_ref[...])
    if scale != 1.0:             # loss_weight fused in (saves a full HBM pass)
        d = d * scale
    o_ref[...] = d.astype(o_ref.dtype)


def _l1_none_w_kernel(p_ref, t_ref, w_ref, o_ref, *, scale):
    # |pred - target| computed in input dtype (matches F.l1_loss), then
    # multiplied by the weight in the promoted output dtype.
    d = jnp.abs(p_ref[...] - t_ref[...]).astype(o_ref.dtype)
    d = d * w_ref[...].astype(o_ref.dtype)
    if scale != 1.0:
        d = d * scale
    o_ref[...] = d


def _l1_partial_kernel(p_ref, t_ref, o_ref, *, tail_rows, tile_axis):
    # Per-block (8,128) f32 partial sum of |pred - target|.
    s = jnp.abs(p_ref[...].astype(jnp.float32) - t_ref[...].astype(jnp.float32))

    def emit(valid):
        o_ref[...] = _partial_sum(_mask_rows(s, valid))

    _masked_store(tail_rows, tile_axis, emit)


def _l1_partial_w_sum_kernel(p_ref, t_ref, w_ref, lo_ref, *, tail_rows, tile_axis):
    # Per-block partial sum of |pred - target| * w (loss partial only).
    w = w_ref[...].astype(jnp.float32)
    s = jnp.abs(p_ref[...].astype(jnp.float32)
                - t_ref[...].astype(jnp.float32)) * w

    def emit(valid):
        lo_ref[...] = _partial_sum(_mask_rows(s, valid))

    _masked_store(tail_rows, tile_axis, emit)


def _l1_partial_w_mean_kernel(p_ref, t_ref, w_ref, lo_ref, wo_ref, *,
                              tail_rows, tile_axis):
    # Per-block partial sums of |pred - target| * w and of w (for the
    # weighted-mean denominator).
    w = w_ref[...].astype(jnp.float32)
    s = jnp.abs(p_ref[...].astype(jnp.float32)
                - t_ref[...].astype(jnp.float32)) * w

    def emit(valid):
        lo_ref[...] = _partial_sum(_mask_rows(s, valid))
        wo_ref[...] = _partial_sum(_mask_rows(w, valid))

    _masked_store(tail_rows, tile_axis, emit)


# ---------------- host-side helpers ----------------

def _sublane_multiple(*dtypes):
    # f32 -> 8, bf16 -> 16, int8/fp8 -> 32 (packed-layout legality).
    pack = max(max(1, 4 // jnp.dtype(dt).itemsize) for dt in dtypes)
    return _SUBLANES * pack


def _pick_block_rows(rows, subm, bytes_per_elem, prefer_split):
    """Largest block (multiple of `subm`, capped by VMEM budget & 2 MiB f32);
    optionally split so >= 2 blocks exist (keeps both v7x TensorCores busy)."""
    per_row = 2 * _LANES * bytes_per_elem                 # 2-deep pipelining
    cap = min(_MAX_BLOCK_ROWS, _VMEM_BUDGET_BYTES // per_row)
    cap = max(subm, (cap // subm) * subm)
    rows_r = -(-rows // subm) * subm
    block = min(cap, rows_r)
    if prefer_split and block == rows_r and rows_r > subm:
        half = -(-(rows_r // 2) // subm) * subm
        block = max(subm, half)
    return block


def _flat_slab(x):
    """Flatten row-major and view as (rows, 128). Pads with zeros only when
    numel % 128 != 0 (no-op for typical image tensors)."""
    flat = x.reshape(-1)
    pad = (-flat.shape[0]) % _LANES
    if pad:
        # TODO(synk): a tail-kernel would avoid this full-array pad copy for
        # lane-misaligned sizes; it is skipped entirely when n % 128 == 0.
        flat = jnp.pad(flat, (0, pad))
    return flat.reshape(-1, _LANES)


# ---------------- channel-broadcast weight path ----------------

def _l1_bcast_weight(pred, target, weight, reduction, scale):
    """weight is (N,1,H,W) with H*W % 128 == 0: serve the channel broadcast via
    the BlockSpec index_map (no C-wide HBM copy; weight tile reused across C)."""
    N, C, H, W = pred.shape
    hw_rows = (H * W) // _LANES
    out_dt = jnp.promote_types(pred.dtype, weight.dtype)

    p_s = pred.reshape(N * C, hw_rows, _LANES)
    t_s = target.reshape(N * C, hw_rows, _LANES)
    w_s = weight.reshape(N, hw_rows, _LANES)

    dts = [pred.dtype, target.dtype, weight.dtype]
    extra = [out_dt] if reduction == 'none' else []
    subm = _sublane_multiple(*dts, *extra)
    bytes_pe = sum(jnp.dtype(d).itemsize for d in dts)
    if reduction == 'none':
        bytes_pe += jnp.dtype(out_dt).itemsize

    block_hw = _pick_block_rows(hw_rows, subm, bytes_pe, prefer_split=False)
    hw_tiles = pl.cdiv(hw_rows, block_hw)
    ragged = hw_tiles * block_hw != hw_rows
    tail_rows = hw_rows - (hw_tiles - 1) * block_hw if ragged else None

    # C innermost: the weight block index is constant across channels, so the
    # pipeline reuses the tile instead of re-fetching it.
    grid = (N, hw_tiles, C)
    x_spec = pl.BlockSpec((None, block_hw, _LANES), lambda n, t, c: (n * C + c, t, 0))
    w_spec = pl.BlockSpec((None, block_hw, _LANES), lambda n, t, c: (n, t, 0))
    cparams = pltpu.CompilerParams(
        dimension_semantics=("parallel", "parallel", "parallel"))

    if reduction == 'none':
        kern = functools.partial(_l1_none_w_kernel, scale=float(scale))
        out = pl.pallas_call(
            kern,
            out_shape=jax.ShapeDtypeStruct((N * C, hw_rows, _LANES), out_dt),
            grid_spec=pltpu.PrefetchScalarGridSpec(
                num_scalar_prefetch=0, grid=grid,
                in_specs=[x_spec, x_spec, w_spec], out_specs=x_spec),
            compiler_params=cparams,
        )(p_s, t_s, w_s)
        return out.reshape(pred.shape)

    part_shape = (N * hw_tiles * C, _SUBLANES, _LANES)
    part_spec = pl.BlockSpec((None, _SUBLANES, _LANES),
                             lambda n, t, c: ((n * hw_tiles + t) * C + c, 0, 0))
    kern = functools.partial(_l1_partial_w_sum_kernel,
                             tail_rows=tail_rows, tile_axis=1)
    l_part = pl.pallas_call(
        kern,
        out_shape=jax.ShapeDtypeStruct(part_shape, jnp.float32),
        grid_spec=pltpu.PrefetchScalarGridSpec(
            num_scalar_prefetch=0, grid=grid,
            in_specs=[x_spec, x_spec, w_spec], out_specs=part_spec),
        compiler_params=cparams,
    )(p_s, t_s, w_s)
    loss_sum = jnp.sum(l_part)
    if reduction == 'sum':
        return loss_sum.astype(out_dt)
    # basicsr weighted mean with a 1-channel weight: denominator = weight.sum()*C.
    # Cheap XLA reduce on the small (un-broadcast) weight.
    w_sum = jnp.sum(weight.astype(jnp.float32)) * jnp.float32(C)
    return (loss_sum / w_sum).astype(out_dt)


# ---------------- main wrapper ----------------

def l1_loss_pallas(pred, target, weight=None, reduction='mean', scale=1.0):
    """Matches basicsr `l1_loss` (weighted_loss-wrapped F.l1_loss).
    `scale` (loss_weight) is fused into the kernel for reduction='none'."""
    assert pred.shape == target.shape
    orig_shape = pred.shape
    n_elems = pred.size

    # Channel-broadcast weight without HBM materialization (lane-aligned H*W).
    if (weight is not None and pred.ndim == 4 and weight.ndim == 4
            and weight.shape != pred.shape
            and weight.shape == (orig_shape[0], 1, orig_shape[2], orig_shape[3])
            and (orig_shape[2] * orig_shape[3]) % _LANES == 0):
        return _l1_bcast_weight(pred, target, weight, reduction, scale)

    if weight is not None and weight.shape != pred.shape:
        # TODO(synk): lane-misaligned H*W still materializes the broadcast copy.
        weight = jnp.broadcast_to(weight, orig_shape)

    out_dt = (pred.dtype if weight is None
              else jnp.promote_types(pred.dtype, weight.dtype))

    p_slab = _flat_slab(pred)
    t_slab = _flat_slab(target)
    w_slab = _flat_slab(weight) if weight is not None else None
    rows = p_slab.shape[0]

    dts = [pred.dtype, target.dtype] + ([weight.dtype] if weight is not None else [])
    extra = [out_dt] if reduction == 'none' else []
    subm = _sublane_multiple(*dts, *extra)
    bytes_pe = sum(jnp.dtype(d).itemsize for d in dts)
    if reduction == 'none':
        bytes_pe += jnp.dtype(out_dt).itemsize

    block_rows = _pick_block_rows(rows, subm, bytes_pe, prefer_split=True)
    num_blocks = pl.cdiv(rows, block_rows)
    ragged = num_blocks * block_rows != rows
    tail_rows = rows - (num_blocks - 1) * block_rows if ragged else None

    grid = (num_blocks,)
    tile = pl.BlockSpec((block_rows, _LANES), lambda i: (i, 0))
    cparams = pltpu.CompilerParams(dimension_semantics=("parallel",))

    if reduction == 'none':
        if weight is None:
            kern = functools.partial(_l1_none_kernel, scale=float(scale))
            ins, in_specs = (p_slab, t_slab), [tile, tile]
        else:
            kern = functools.partial(_l1_none_w_kernel, scale=float(scale))
            ins, in_specs = (p_slab, t_slab, w_slab), [tile, tile, tile]
        out = pl.pallas_call(
            kern,
            out_shape=jax.ShapeDtypeStruct((rows, _LANES), out_dt),
            grid_spec=pltpu.PrefetchScalarGridSpec(
                num_scalar_prefetch=0, grid=grid,
                in_specs=in_specs, out_specs=tile),
            compiler_params=cparams,
        )(*ins)
        if rows * _LANES == n_elems:
            return out.reshape(orig_shape)
        return out.reshape(-1)[:n_elems].reshape(orig_shape)

    # 'sum' / 'mean': per-block (8,128) partials over a fully parallel grid.
    part_shape = (num_blocks, _SUBLANES, _LANES)
    part_spec = pl.BlockSpec((None, _SUBLANES, _LANES), lambda i: (i, 0, 0))

    if weight is None:
        kern = functools.partial(_l1_partial_kernel, tail_rows=tail_rows, tile_axis=0)
        partials = pl.pallas_call(
            kern,
            out_shape=jax.ShapeDtypeStruct(part_shape, jnp.float32),
            grid_spec=pltpu.PrefetchScalarGridSpec(
                num_scalar_prefetch=0, grid=grid,
                in_specs=[tile, tile], out_specs=part_spec),
            compiler_params=cparams,
        )(p_slab, t_slab)
        total = jnp.sum(partials)
        if reduction == 'sum':
            return total.astype(pred.dtype)
        return (total / jnp.float32(n_elems)).astype(pred.dtype)

    if reduction == 'sum':
        # weight partial is discarded for 'sum' -> sum-only kernel.
        kern = functools.partial(_l1_partial_w_sum_kernel,
                                 tail_rows=tail_rows, tile_axis=0)
        l_part = pl.pallas_call(
            kern,
            out_shape=jax.ShapeDtypeStruct(part_shape, jnp.float32),
            grid_spec=pltpu.PrefetchScalarGridSpec(
                num_scalar_prefetch=0, grid=grid,
                in_specs=[tile, tile, tile], out_specs=part_spec),
            compiler_params=cparams,
        )(p_slab, t_slab, w_slab)
        return jnp.sum(l_part).astype(out_dt)

    kern = functools.partial(_l1_partial_w_mean_kernel,
                             tail_rows=tail_rows, tile_axis=0)
    l_part, w_part = pl.pallas_call(
        kern,
        out_shape=(jax.ShapeDtypeStruct(part_shape, jnp.float32),
                   jax.ShapeDtypeStruct(part_shape, jnp.float32)),
        grid_spec=pltpu.PrefetchScalarGridSpec(
            num_scalar_prefetch=0, grid=grid,
            in_specs=[tile, tile, tile],
            out_specs=[part_spec, part_spec]),
        compiler_params=cparams,
    )(p_slab, t_slab, w_slab)
    # basicsr weighted mean: loss.sum() / weight.sum() (C-broadcast weight), no eps.
    return (jnp.sum(l_part) / jnp.sum(w_part)).astype(out_dt)


class L1Loss:
    """L1 (MAE) loss; mirrors basicsr L1Loss forward semantics."""

    def __init__(self, loss_weight=1.0, reduction='mean', **kwargs):
        if reduction not in ['none', 'mean', 'sum']:
            raise ValueError(f'Unsupported reduction mode: {reduction}.')
        self.loss_weight = loss_weight
        self.reduction = reduction

    def __call__(self, pred, target, weight=None, **kwargs):
        if self.reduction == 'none':
            # loss_weight fused into the kernel (no extra full-array XLA pass).
            return l1_loss_pallas(pred, target, weight, reduction='none',
                                  scale=self.loss_weight)
        loss = l1_loss_pallas(pred, target, weight, reduction=self.reduction)
        return self.loss_weight * loss


if __name__ == "__main__":
    key = jax.random.PRNGKey(0)
    k1, k2, k3 = jax.random.split(key, 3)
    N, C, H, W = 2, 4, 16, 16
    pred = jax.random.normal(k1, (N, C, H, W), dtype=jnp.float32)
    target = jax.random.normal(k2, (N, C, H, W), dtype=jnp.float32)
    weight = jax.random.uniform(k3, (N, C, H, W), dtype=jnp.float32)

    loss_mean = L1Loss(loss_weight=1.0, reduction='mean')

    # mean, no weight
    out_mean = jax.block_until_ready(loss_mean(pred, target))
    assert jnp.allclose(out_mean, jnp.mean(jnp.abs(pred - target)), rtol=1e-5, atol=1e-6)

    # sum, no weight
    out_sum = jax.block_until_ready(L1Loss(reduction='sum')(pred, target))
    assert jnp.allclose(out_sum, jnp.sum(jnp.abs(pred - target)), rtol=1e-5, atol=1e-4)

    # none with fused loss_weight
    out_none = jax.block_until_ready(L1Loss(loss_weight=0.5, reduction='none')(pred, target))
    assert out_none.shape == (N, C, H, W)
    assert jnp.allclose(out_none, 0.5 * jnp.abs(pred - target), rtol=1e-6, atol=1e-6)

    # full-shape weight: mean and sum (flat layout)
    out_wmean = jax.block_until_ready(loss_mean(pred, target, weight))
    ref_wmean = jnp.sum(jnp.abs(pred - target) * weight) / jnp.sum(weight)
    assert jnp.allclose(out_wmean, ref_wmean, rtol=1e-5, atol=1e-6)
    out_wsum = jax.block_until_ready(L1Loss(reduction='sum')(pred, target, weight))
    assert jnp.allclose(out_wsum, jnp.sum(jnp.abs(pred - target) * weight), rtol=1e-5, atol=1e-4)

    # (N,1,H,W) weight: channel broadcast served through the BlockSpec (no HBM copy)
    w1 = jax.random.uniform(k3, (N, 1, H, W), dtype=jnp.float32)
    wb = jnp.broadcast_to(w1, pred.shape)
    out_w1 = jax.block_until_ready(loss_mean(pred, target, w1))
    ref_w1 = jnp.sum(jnp.abs(pred - target) * wb) / jnp.sum(wb)
    assert jnp.allclose(out_w1, ref_w1, rtol=1e-5, atol=1e-6)
    out_w1s = jax.block_until_ready(L1Loss(reduction='sum')(pred, target, w1))
    assert jnp.allclose(out_w1s, jnp.sum(jnp.abs(pred - target) * wb), rtol=1e-5, atol=1e-4)
    out_w1n = jax.block_until_ready(L1Loss(loss_weight=2.0, reduction='none')(pred, target, w1))
    assert jnp.allclose(out_w1n, 2.0 * jnp.abs(pred - target) * wb, rtol=1e-6, atol=1e-6)

    # ragged shape: exercises lane padding + masked (last-block-only) partials
    pr = jax.random.normal(k1, (3, 3, 7, 5), dtype=jnp.float32)
    tr = jax.random.normal(k2, (3, 3, 7, 5), dtype=jnp.float32)
    out_r = jax.block_until_ready(L1Loss(reduction='mean')(pr, tr))
    assert jnp.allclose(out_r, jnp.mean(jnp.abs(pr - tr)), rtol=1e-5, atol=1e-6)
    out_rn = jax.block_until_ready(L1Loss(reduction='none')(pr, tr))
    assert jnp.allclose(out_rn, jnp.abs(pr - tr), rtol=1e-6, atol=1e-6)

    # bf16 inputs: exercises the 16-row sublane rounding path
    pb = pred.astype(jnp.bfloat16)
    tb = target.astype(jnp.bfloat16)
    out_b = jax.block_until_ready(L1Loss(reduction='mean')(pb, tb))
    ref_b = jnp.mean(jnp.abs(pb.astype(jnp.float32) - tb.astype(jnp.float32)))
    assert jnp.allclose(out_b.astype(jnp.float32), ref_b, rtol=2e-2, atol=2e-2)

    print("KERNEL_OK")
</pallas_src>

<mosaic_0001>
module attributes {stable_mosaic.version = 11 : i64} {
  func.func @_l1_partial_kernel(%arg0: i32, %arg1: memref<8x128xf32, #tpu.memory_space<vmem>>, %arg2: memref<8x128xf32, #tpu.memory_space<vmem>>, %arg3: memref<1x8x128xf32, #tpu.memory_space<vmem>>) attributes {dimension_semantics = [#tpu.dimension_semantics<parallel>], iteration_bounds = array<i64: 2>, scalar_prefetch = 0 : i64, scratch_operands = 0 : i64, tpu.core_type = #tpu.core_type<tc>, window_params = [{transform_indices = @transform_0, window_bounds = array<i64: 8, 128>}, {transform_indices = @transform_1, window_bounds = array<i64: 8, 128>}, {transform_indices = @transform_2, window_bounds = array<i64: 1, 8, 128>}]} {
    %c0 = arith.constant 0 : index
    %c0_0 = arith.constant 0 : index
    %0 = vector.load %arg1[%c0, %c0_0] : memref<8x128xf32, #tpu.memory_space<vmem>>, vector<8x128xf32>
    %c0_1 = arith.constant 0 : index
    %c0_2 = arith.constant 0 : index
    %1 = vector.load %arg2[%c0_1, %c0_2] : memref<8x128xf32, #tpu.memory_space<vmem>>, vector<8x128xf32>
    %2 = arith.subf %0, %1 : vector<8x128xf32>
    %3 = math.absf %2 : vector<8x128xf32>
    %4 = vector.shape_cast %3 : vector<8x128xf32> to vector<1x8x128xf32>
    %cst = arith.constant dense<0.000000e+00> : vector<8x128xf32>
    %5 = vector.multi_reduction <add>, %4, %cst [0] : vector<1x8x128xf32> to vector<8x128xf32>
    %c0_3 = arith.constant 0 : index
    %c0_4 = arith.constant 0 : index
    %c0_5 = arith.constant 0 : index
    %6 = vector.load %arg3[%c0_3, %c0_4, %c0_5] : memref<1x8x128xf32, #tpu.memory_space<vmem>>, vector<1x8x128xf32>
    %7 = vector.shape_cast %6 : vector<1x8x128xf32> to vector<8x128xf32>
    %8 = vector.shape_cast %5 : vector<8x128xf32> to vector<1x8x128xf32>
    tpu.vector_store %arg3[%c0_3, %c0_4, %c0_5], %8 {strides = array<i32>} : memref<1x8x128xf32, #tpu.memory_space<vmem>>, vector<1x8x128xf32>,
    return
  }
  func.func @transform_0(%arg0: i32) -> (i32, i32) {
    %c0_i32 = arith.constant 0 : i32
    %c0_i32_0 = arith.constant 0 : i32
    return %arg0, %c0_i32 : i32, i32
  }
  func.func @transform_1(%arg0: i32) -> (i32, i32) {
    %c0_i32 = arith.constant 0 : i32
    %c0_i32_0 = arith.constant 0 : i32
    return %arg0, %c0_i32 : i32, i32
  }
  func.func @transform_2(%arg0: i32) -> (i32, i32, i32) {
    %c0_i32 = arith.constant 0 : i32
    %c0_i32_0 = arith.constant 0 : i32
    %c0_i32_1 = arith.constant 0 : i32
    return %arg0, %c0_i32, %c0_i32_0 : i32, i32, i32
  }
}

</mosaic_0001>

<llo_original>
// kernel: tpu_custom_call.1
$region0: #{tpu_custom_call.1}
  #allocation0 [shape = 'u32[]', space=smem, size = 0x4, offset = 0x4, fixed_abs, tag = 'smem constant byte address 0x4 - core index']
  #allocation1 [shape = 'u32[144,128]{1,0:T(1,128)}', space=vmem, size = 0x12000, scoped, tag = 'internal scratch']
  %s0 = inlined_call_operand.hbm [shape: f32[16,128], index: 0, kind: input, shape index: {}]
  %s1 = inlined_call_operand.hbm [shape: f32[16,128], index: 1, kind: input, shape index: {}]
  %s2 = inlined_call_operand.hbm [shape: f32[2,8,128], index: 2, kind: output, shape index: {}]
  %s3 = sld [smem:[#allocation0]]
  $region49: #{tpu_custom_call.1} parent=0
    _
  %s5 = ssub.s32 1, %s3
  %s6 = scalar_select 0, %s5, %s3
  $region1: #{tpu_custom_call.1} parent=0
    #allocation2 [shape = 'u8[8192]{0}', space=vmem, size = 0x2000, scoped, tag = 'input window, operand 0']
    #allocation3 [shape = 's32[2]{0}', space=sflag, size = 0x8, scoped, tag = 'scoped memory for tpu_custom_call.1']
    #allocation4 [shape = 's32[2]{0}', space=sflag, size = 0x8, scoped, tag = 'scoped memory for tpu_custom_call.1']
    #allocation5 [shape = 'u8[8192]{0}', space=vmem, size = 0x2000, scoped, tag = 'input window, operand 1']
    #allocation6 [shape = 's32[2]{0}', space=sflag, size = 0x8, scoped, tag = 'scoped memory for tpu_custom_call.1']
    #allocation7 [shape = 'u8[8192]{0}', space=vmem, size = 0x2000, scoped, tag = 'output window, operand 0']
    %7 = vsyncpa [#allocation3], 0
    %s8 = scalar_lea.sflag [#allocation3], 1
    %9 = vsyncpa %s8, 0
    %10 = vsyncpa [#allocation6], 0
    %s11 = scalar_lea.sflag [#allocation6], 1
    %12 = vsyncpa %s11, 0
    %13 = vsyncpa [#allocation4], 0
    %s14 = scalar_lea.sflag [#allocation4], 1
    %15 = vsyncpa %s14, 0
    loop: start=0, step=1, limit=4
    $region2: #{tpu_custom_call.1} parent=1 // loop_pre_header
      _
    $region3: #{tpu_custom_call.1} parent=1 // loop_header
      %s17 = sphi 0, %s21
      %p18 = scmp.ge.s32.totalorder %s17, 4
      %s27 = sphi 0, %s29
      %s30 = sphi 0, %s27
      %s31 = sphi 0, %s30
      %s47 = sphi 0, %s31
      %s53 = sphi 0, %s55
      %s56 = sphi 0, %s53
      %s57 = sphi 0, %s56
      %s73 = sphi 0, %s57
      %s79 = sphi 0, %s81
      %s82 = sphi 0, %s79
      %s83 = sphi 0, %s82
      %s99 = sphi 0, %s83
    $region4: #{tpu_custom_call.1} parent=1 // loop_header_branch
      %20 = sbr.rel (%p18) target = $region8
    $region5: #{tpu_custom_call.1} parent=1 // loop_body
      %s22 = ssub.s32 %s17, 1
      %s23 = ssub.s32 %s17, 2
      %s24 = sadd.s32 %s17, 1
      %s25 = ssub.s32 %s17, %s24
      %p26 = scmp.eq.s32.totalorder %s25, 0
      %s28 = sadd.s32 %s27, 1
      %s29 = scalar_select %p26, %s27, %s28
      %p32 = pneg %p26
      %p33 = scmp.eq.s32.totalorder %s17, 1
      %p34 = por %p32, %p33
      %p35 = scmp.ne.s32.totalorder %s27, %s30
      %p36 = scmp.eq.s32.totalorder %s17, 0
      %p37 = por %p35, %p36
      %p38 = scmp.ne.s32.totalorder %s27, %s30
      %p39 = scmp.eq.s32.totalorder %s22, 1
      %p40 = por %p38, %p39
      %p41 = scmp.ne.s32.totalorder %s30, %s31
      %p42 = scmp.eq.s32.totalorder %s22, 0
      %p43 = por %p41, %p42
      %p44 = scmp.ne.s32.totalorder %s30, %s31
      %p45 = scmp.eq.s32.totalorder %s23, 1
      %p46 = por %p44, %p45
      %p48 = scmp.ne.s32.totalorder %s31, %s47
      %p49 = scmp.eq.s32.totalorder %s23, 0
      %p50 = por %p48, %p49
      %s51 = ssub.s32 %s17, %s24
      %p52 = scmp.eq.s32.totalorder %s51, 0
      %s54 = sadd.s32 %s53, 1
      %s55 = scalar_select %p52, %s53, %s54
      %p58 = pneg %p52
      %p59 = scmp.eq.s32.totalorder %s17, 1
      %p60 = por %p58, %p59
      %p61 = scmp.ne.s32.totalorder %s53, %s56
      %p62 = scmp.eq.s32.totalorder %s17, 0
      %p63 = por %p61, %p62
      %p64 = scmp.ne.s32.totalorder %s53, %s56
      %p65 = scmp.eq.s32.totalorder %s22, 1
      %p66 = por %p64, %p65
      %p67 = scmp.ne.s32.totalorder %s56, %s57
      %p68 = scmp.eq.s32.totalorder %s22, 0
      %p69 = por %p67, %p68
      %p70 = scmp.ne.s32.totalorder %s56, %s57
      %p71 = scmp.eq.s32.totalorder %s23, 1
      %p72 = por %p70, %p71
      %p74 = scmp.ne.s32.totalorder %s57, %s73
      %p75 = scmp.eq.s32.totalorder %s23, 0
      %p76 = por %p74, %p75
      %s77 = ssub.s32 %s17, %s24
      %p78 = scmp.eq.s32.totalorder %s77, 0
      %s80 = sadd.s32 %s79, 1
      %s81 = scalar_select %p78, %s79, %s80
      %p84 = pneg %p78
      %p85 = scmp.eq.s32.totalorder %s17, 1
      %p86 = por %p84, %p85
      %p87 = scmp.ne.s32.totalorder %s79, %s82
      %p88 = scmp.eq.s32.totalorder %s17, 0
      %p89 = por %p87, %p88
      %p90 = scmp.ne.s32.totalorder %s79, %s82
      %p91 = scmp.eq.s32.totalorder %s22, 1
      %p92 = por %p90, %p91
      %p93 = scmp.ne.s32.totalorder %s82, %s83
      %p94 = scmp.eq.s32.totalorder %s22, 0
      %p95 = por %p93, %p94
      %p96 = scmp.ne.s32.totalorder %s82, %s83
      %p97 = scmp.eq.s32.totalorder %s23, 1
      %p98 = por %p96, %p97
      %p100 = scmp.ne.s32.totalorder %s83, %s99
      %p101 = scmp.eq.s32.totalorder %s23, 0
      %p102 = por %p100, %p101
      %p103 = scmp.le.s32.totalorder 1, %s17
      %p104 = scmp.lt.s32.totalorder %s17, 3
      %p105 = pnand %p103, %p104
      %p106 = pneg %p105
      // Predicated region
      $region9: #{tpu_custom_call.1} parent=5 // pred_check
        _
      $region10: #{tpu_custom_call.1} parent=5 // pred_check_branch
        %108 = sbr.rel (%p105) target = $region12
      $region11: #{tpu_custom_call.1} parent=5 // pred_region
        %s109 = ssub.s32 %s17, 1
      $region12: #{tpu_custom_call.1} parent=5 // pred_fallthru
        _
      %p110 = scmp.lt.s32.totalorder %s17, 2
      // Predicated region
      $region13: #{tpu_custom_call.1} parent=5 // pred_check
        %p111 = pneg %p110
      $region14: #{tpu_custom_call.1} parent=5 // pred_check_branch
        %113 = sbr.rel (%p111) target = $region16
      $region15: #{tpu_custom_call.1} parent=5 // pred_region
        // Predicated region
        $region17: #{tpu_custom_call.1} parent=15 // pred_check
          %p114 = pneg %p37
        $region18: #{tpu_custom_call.1} parent=15 // pred_check_branch
          %116 = sbr.rel (%p114) target = $region20
        $region19: #{tpu_custom_call.1} parent=15 // pred_region
          %s117 = sand.u32 %s27, 1
          %s118 = scalar_lea.sflag [#allocation3], %s117
          %s119 = sand.u32 %s27, 1
          %s120 = smul.addr %s119, 8
          %s121 = scalar_lea.vmem [#allocation2], %s120
          %s123 = ssub.s32 128, 128
          %124 = vsyncadd %s118, %s123
          %s125 = smul.addr %s17, 128
          %s126 = scalar_lea.hbm %s0, %s125
          %s128 = sshll.u32 %s121, 4
          %s129 = int_to_ptr.vmem [resolvable:$true] %s128
          %131 = dma.hbm_to_vmem [thread:$0]  %s126, 128, %s129, %s118
        $region20: #{tpu_custom_call.1} parent=15 // pred_fallthru
          _
        // Predicated region
        $region21: #{tpu_custom_call.1} parent=15 // pred_check
          %p132 = pneg %p63
        $region22: #{tpu_custom_call.1} parent=15 // pred_check_branch
          %134 = sbr.rel (%p132) target = $region24
        $region23: #{tpu_custom_call.1} parent=15 // pred_region
          %s135 = sand.u32 %s53, 1
          %s136 = scalar_lea.sflag [#allocation6], %s135
          %s137 = sand.u32 %s53, 1
          %s138 = smul.addr %s137, 8
          %s139 = scalar_lea.vmem [#allocation5], %s138
          %s141 = ssub.s32 128, 128
          %142 = vsyncadd %s136, %s141
          %s143 = smul.addr %s17, 128
          %s144 = scalar_lea.hbm %s1, %s143
          %s146 = sshll.u32 %s139, 4
          %s147 = int_to_ptr.vmem [resolvable:$true] %s146
          %149 = dma.hbm_to_vmem [thread:$0]  %s144, 128, %s147, %s136
        $region24: #{tpu_custom_call.1} parent=15 // pred_fallthru
          _
      $region16: #{tpu_custom_call.1} parent=5 // pred_fallthru
        _
      %p150 = scmp.le.s32.totalorder 1, %s17
      %p151 = scmp.lt.s32.totalorder %s17, 3
      %p152 = pnand %p150, %p151
      %p153 = pneg %p152
      // Predicated region
      $region25: #{tpu_custom_call.1} parent=5 // pred_check
        _
      $region26: #{tpu_custom_call.1} parent=5 // pred_check_branch
        %155 = sbr.rel (%p152) target = $region28
      $region27: #{tpu_custom_call.1} parent=5 // pred_region
        %s156 = ssub.s32 %s17, 1
        %s157 = sand.u32 %s30, 1
        %s158 = scalar_lea.sflag [#allocation3], %s157
        %s159 = sand.u32 %s30, 1
        %s160 = smul.addr %s159, 8
        %s161 = scalar_lea.vmem [#allocation2], %s160
        // Predicated region
        $region29: #{tpu_custom_call.1} parent=27 // pred_check
          %p162 = pneg %p43
        $region30: #{tpu_custom_call.1} parent=27 // pred_check_branch
          %164 = sbr.rel (%p162) target = $region32
        $region31: #{tpu_custom_call.1} parent=27 // pred_region
          %165 = dma.done %s158, 128
        $region32: #{tpu_custom_call.1} parent=27 // pred_fallthru
          _
        %s166 = sand.u32 %s56, 1
        %s167 = scalar_lea.sflag [#allocation6], %s166
        %s168 = sand.u32 %s56, 1
        %s169 = smul.addr %s168, 8
        %s170 = scalar_lea.vmem [#allocation5], %s169
        // Predicated region
        $region33: #{tpu_custom_call.1} parent=27 // pred_check
          %p171 = pneg %p69
        $region34: #{tpu_custom_call.1} parent=27 // pred_check_branch
          %173 = sbr.rel (%p171) target = $region36
        $region35: #{tpu_custom_call.1} parent=27 // pred_region
          %174 = dma.done %s167, 128
        $region36: #{tpu_custom_call.1} parent=27 // pred_fallthru
          _
        %s175 = sand.u32 %s30, 1
        %s176 = scalar_lea.sflag [#allocation3], %s175
        %s177 = sand.u32 %s30, 1
        %s178 = smul.addr %s177, 8
        %s179 = scalar_lea.vmem [#allocation2], %s178
        %p180 = pneg %p43
        %p181 = pneg %p40
        %s182 = sand.u32 %s56, 1
        %s183 = scalar_lea.sflag [#allocation6], %s182
        %s184 = sand.u32 %s56, 1
        %s185 = smul.addr %s184, 8
        %s186 = scalar_lea.vmem [#allocation5], %s185
        %p187 = pneg %p69
        %p188 = pneg %p66
        %p189 = pneg %p95
        %p190 = pneg %p92
        %s191 = sand.u32 %s82, 1
        %s192 = scalar_lea.sflag [#allocation4], %s191
        %s193 = sand.u32 %s82, 1
        %s194 = smul.addr %s193, 8
        %s195 = scalar_lea.vmem [#allocation7], %s194
        %v196 = vld [vmem:[%s161] sm:$0xff]
        %v197 = vld [vmem:[%s170] sm:$0xff]
        %v198 = vsub.f32 %v196, %v197
        %v199 = vand.u32 2147483647, %v198
        %v200 = vadd.f32 %v199, 0.0
        %201 = vst [vmem:[%s195] sm:$0xff] %v200
        %s202 = sand.u32 %s82, 1
        %s203 = scalar_lea.sflag [#allocation4], %s202
        %s204 = sand.u32 %s82, 1
        %s205 = smul.addr %s204, 8
        %s206 = scalar_lea.vmem [#allocation7], %s205
        // Predicated region
        $region37: #{tpu_custom_call.1} parent=27 // pred_check
          %p207 = pneg %p92
        $region38: #{tpu_custom_call.1} parent=27 // pred_check_branch
          %209 = sbr.rel (%p207) target = $region40
        $region39: #{tpu_custom_call.1} parent=27 // pred_region
          %s211 = ssub.s32 128, 128
          %212 = vsyncadd %s203, %s211
          %s213 = smul.addr %s22, 128
          %s214 = scalar_lea.hbm %s2, %s213
          %s216 = sshll.u32 %s206, 4
          %s217 = int_to_ptr.vmem [resolvable:$true] %s216
          %219 = dma.vmem_to_hbm [thread:$0]  %s217, 128, %s214, %s203
        $region40: #{tpu_custom_call.1} parent=27 // pred_fallthru
          _
      $region28: #{tpu_custom_call.1} parent=5 // pred_fallthru
        _
      %p220 = scmp.le.s32.totalorder 2, %s17
      // Predicated region
      $region41: #{tpu_custom_call.1} parent=5 // pred_check
        %p221 = pneg %p220
      $region42: #{tpu_custom_call.1} parent=5 // pred_check_branch
        %223 = sbr.rel (%p221) target = $region44
      $region43: #{tpu_custom_call.1} parent=5 // pred_region
        %s224 = ssub.s32 %s17, 2
        // Predicated region
        $region45: #{tpu_custom_call.1} parent=43 // pred_check
          %p225 = pneg %p98
        $region46: #{tpu_custom_call.1} parent=43 // pred_check_branch
          %227 = sbr.rel (%p225) target = $region48
        $region47: #{tpu_custom_call.1} parent=43 // pred_region
          %s228 = sand.u32 %s83, 1
          %s229 = scalar_lea.sflag [#allocation4], %s228
          %s230 = sand.u32 %s83, 1
          %s231 = smul.addr %s230, 8
          %s232 = scalar_lea.vmem [#allocation7], %s231
          %233 = dma.done %s229, 128
        $region48: #{tpu_custom_call.1} parent=43 // pred_fallthru
          _
      $region44: #{tpu_custom_call.1} parent=5 // pred_fallthru
        _
    $region6: #{tpu_custom_call.1} parent=1 // loop_footer
      %s21 = sadd.s32 1, %s17
    $region7: #{tpu_custom_call.1} parent=1 // loop_footer_branch
      %16 = sbr.rel target = $region3
    $region8: #{tpu_custom_call.1} parent=1 // loop_exit
      _
    %234 = vsyncpa [#allocation3], 1
    %s235 = scalar_lea.sflag [#allocation3], 1
    %236 = vsyncpa %s235, 1
    %237 = vsyncpa [#allocation6], 1
    %s238 = scalar_lea.sflag [#allocation6], 1
    %239 = vsyncpa %s238, 1
    %240 = vsyncpa [#allocation4], 1
    %s241 = scalar_lea.sflag [#allocation4], 1
    %242 = vsyncpa %s241, 1

</llo_original>
